<compile_context>
chip_gen: v7x
topology: tpu7x:2x2x1
jax: 0.10.0
libtpu: 0.0.40
codegen_flags: <defaults>
</compile_context>

<pallas_src>
import functools

import jax
import jax.numpy as jnp
from jax import lax
from jax.experimental import pallas as pl
from jax.experimental.pallas import tpu as pltpu

LANE = 128
SUBLANE = 8


def _round_up(v, m):
    return ((v + m - 1) // m) * m


# --------------------------------------------------------------------------- #
# Kernel
# --------------------------------------------------------------------------- #
def brain_kernel(x_ref, w1_ref, b1_ref, wh_ref, bh_ref, out_ref, *,
                 action_count, matmul_dtype):
    x = x_ref[...]                                                   # [TB, F]
    w1 = w1_ref[...]                                                 # [F, H_pad]
    wh = wh_ref[...]                                                 # [H_pad, 128]

    if matmul_dtype != jnp.float32:
        # Optional low-precision MXU operands (v6e/v7x lever once B/H grow).
        x = x.astype(matmul_dtype)
        w1 = w1.astype(matmul_dtype)

    # affine1 + ReLU  (bias & elementwise math stay in f32)
    h = jnp.dot(x, w1, preferred_element_type=jnp.float32) + b1_ref[...]
    h = jnp.maximum(h, 0.0)                                          # [TB, H_pad]

    if matmul_dtype != jnp.float32:
        h_mm = h.astype(matmul_dtype)
        wh = wh.astype(matmul_dtype)
    else:
        h_mm = h

    # fused heads: cols [0, A) = actor scores, col A = value, rest = zero pad
    scores = (jnp.dot(h_mm, wh, preferred_element_type=jnp.float32)
              + bh_ref[...])                                         # [TB, 128]

    col = lax.broadcasted_iota(jnp.int32, scores.shape, 1)
    is_action = col < action_count

    # numerically stable softmax over the actor columns only
    s_masked = jnp.where(is_action, scores, -jnp.inf)
    m = jnp.max(s_masked, axis=-1, keepdims=True)
    e = jnp.exp(s_masked - m)                                        # value/pad cols -> 0
    denom = jnp.sum(e, axis=-1, keepdims=True)
    probs = e / denom           # exact reciprocal: single [TB,1] column, ~free

    # single lane-dense store: probs in actor cols, raw score (= value) in col A
    out_ref[...] = jnp.where(col == action_count, scores, probs)


# --------------------------------------------------------------------------- #
# One-time parameter fusion (hoisted out of the per-step forward path)
# --------------------------------------------------------------------------- #
def fuse_brain_params(w1, b1, wa, ba, wv, bv):
    """Pad H to 128 lanes and fuse the value head as an extra output column.

    Returns (w1p, b1p, wh, bh, action_count). Do this ONCE (at init / param
    load); do not rebuild it inside the RL inner loop.
    """
    F, H = w1.shape
    A = wa.shape[1]
    h_pad = _round_up(H, LANE)
    out_pad = _round_up(A + 1, LANE)

    w1p = jnp.zeros((F, h_pad), jnp.float32).at[:, :H].set(w1)
    b1p = jnp.zeros((1, h_pad), jnp.float32).at[:, :H].set(b1)
    # padded hidden cols: relu(0 + 0) = 0, and padded wh rows are 0 -> no effect
    wh = (jnp.zeros((h_pad, out_pad), jnp.float32)
          .at[:H, :A].set(wa)
          .at[:H, A:A + 1].set(wv))
    bh = (jnp.zeros((1, out_pad), jnp.float32)
          .at[:, :A].set(ba)
          .at[:, A:A + 1].set(bv))
    return w1p, b1p, wh, bh, A


# --------------------------------------------------------------------------- #
# Forward wrapper
# --------------------------------------------------------------------------- #
def brain_forward(x, fused_params, *, block_b=512, matmul_dtype=jnp.float32):
    """x: [B, F]; fused_params from fuse_brain_params()."""
    w1p, b1p, wh, bh, A = fused_params
    B, F = x.shape
    h_pad = w1p.shape[1]
    out_pad = wh.shape[1]

    # Batch tile: multiple of 8 (sublane), default up to 512 rows so per-step
    # overhead (~0.35us) is amortized; working set stays a few MiB of VMEM.
    b8 = _round_up(B, SUBLANE)
    tb = min(block_b, b8)
    if b8 >= 2 * SUBLANE and b8 // tb < 2:
        # Make the grid >= 2 steps so the "parallel" batch axis can shard
        # across v7x's two TensorCores (harmless on 1-TC v5e/v6e).
        tb = min(tb, _round_up(pl.cdiv(b8, 2), SUBLANE))
    b_pad = _round_up(B, tb)
    if b_pad != B:
        x = jnp.pad(x, ((0, b_pad - B), (0, 0)))

    out = pl.pallas_call(
        functools.partial(brain_kernel, action_count=A,
                          matmul_dtype=matmul_dtype),
        grid=(b_pad // tb,),
        in_specs=[
            pl.BlockSpec((tb, F), lambda i: (i, 0)),          # x: tiled over batch
            pl.BlockSpec((F, h_pad), lambda i: (0, 0)),       # weights stay resident
            pl.BlockSpec((1, h_pad), lambda i: (0, 0)),
            pl.BlockSpec((h_pad, out_pad), lambda i: (0, 0)),
            pl.BlockSpec((1, out_pad), lambda i: (0, 0)),
        ],
        out_specs=pl.BlockSpec((tb, out_pad), lambda i: (i, 0)),
        out_shape=jax.ShapeDtypeStruct((b_pad, out_pad), jnp.float32),
        compiler_params=pltpu.CompilerParams(
            dimension_semantics=("parallel",)),               # v7x: shard batch over 2 TCs
    )(x, w1p, b1p, wh, bh)

    # NOTE: the padded slab layout is [probs(0:A) | value(A) | zeros]; only the
    # slices below are meaningful.
    probs = out[:B, :A]
    value = out[:B, A:A + 1]
    return probs, value


# --------------------------------------------------------------------------- #
# Init + reference
# --------------------------------------------------------------------------- #
def init_params(key, state_features_count, action_count, hidden_size):
    """Deterministic init mimicking nn.Linear's U(-1/sqrt(fan_in), 1/sqrt(fan_in))."""
    ks = jax.random.split(key, 6)

    def u(k, shape, fan_in):
        lim = 1.0 / jnp.sqrt(jnp.float32(fan_in))
        return jax.random.uniform(k, shape, jnp.float32, -lim, lim)

    w1 = u(ks[0], (state_features_count, hidden_size), state_features_count)
    b1 = u(ks[1], (1, hidden_size), state_features_count)
    wa = u(ks[2], (hidden_size, action_count), hidden_size)
    ba = u(ks[3], (1, action_count), hidden_size)
    wv = u(ks[4], (hidden_size, 1), hidden_size)
    bv = u(ks[5], (1, 1), hidden_size)
    return w1, b1, wa, ba, wv, bv


def reference_forward(x, w1, b1, wa, ba, wv, bv):
    h = jnp.maximum(x @ w1 + b1, 0.0)
    probs = jax.nn.softmax(h @ wa + ba, axis=-1)
    value = h @ wv + bv
    return probs, value


if __name__ == "__main__":
    key = jax.random.PRNGKey(0)
    k_x, k_p = jax.random.split(key)

    B = 2                       # batch of environment states
    state_features_count = 4
    action_count = 8
    hidden_size = 64            # matches the nn.Module default

    x = jax.random.normal(k_x, (B, state_features_count), jnp.float32)
    params = init_params(k_p, state_features_count, action_count, hidden_size)

    # Fuse/pad parameters ONCE (hoisted off the per-step critical path).
    fused = fuse_brain_params(*params)

    probs, value = brain_forward(x, fused)
    jax.block_until_ready((probs, value))

    # correctness vs pure-JAX reference
    ref_probs, ref_value = reference_forward(x, *params)
    assert probs.shape == (B, action_count)
    assert value.shape == (B, 1)
    assert jnp.allclose(jnp.sum(probs, axis=-1), 1.0, atol=1e-5)
    assert jnp.allclose(probs, ref_probs, atol=1e-5, rtol=1e-5)
    assert jnp.allclose(value, ref_value, atol=1e-5, rtol=1e-5)

    print("KERNEL_OK")
</pallas_src>

<mosaic_0001>
module attributes {stable_mosaic.version = 11 : i64} {
  func.func @brain_kernel(%arg0: i32, %arg1: memref<8x4xf32, #tpu.memory_space<vmem>>, %arg2: memref<4x128xf32, #tpu.memory_space<vmem>>, %arg3: memref<1x128xf32, #tpu.memory_space<vmem>>, %arg4: memref<128x128xf32, #tpu.memory_space<vmem>>, %arg5: memref<1x128xf32, #tpu.memory_space<vmem>>, %arg6: memref<8x128xf32, #tpu.memory_space<vmem>>) attributes {dimension_semantics = [#tpu.dimension_semantics<parallel>], iteration_bounds = array<i64: 1>, scalar_prefetch = 0 : i64, scratch_operands = 0 : i64, tpu.core_type = #tpu.core_type<tc>, window_params = [{transform_indices = @transform_0, window_bounds = array<i64: 8, 4>}, {pipeline_mode = #tpu.pipeline_mode<synchronous>, transform_indices = @transform_1, window_bounds = array<i64: 4, 128>}, {pipeline_mode = #tpu.pipeline_mode<synchronous>, transform_indices = @transform_2, window_bounds = array<i64: 1, 128>}, {pipeline_mode = #tpu.pipeline_mode<synchronous>, transform_indices = @transform_3, window_bounds = array<i64: 128, 128>}, {pipeline_mode = #tpu.pipeline_mode<synchronous>, transform_indices = @transform_4, window_bounds = array<i64: 1, 128>}, {transform_indices = @transform_5, window_bounds = array<i64: 8, 128>}]} {
    %c0 = arith.constant 0 : index
    %c0_0 = arith.constant 0 : index
    %0 = vector.load %arg1[%c0, %c0_0] : memref<8x4xf32, #tpu.memory_space<vmem>>, vector<8x4xf32>
    %c0_1 = arith.constant 0 : index
    %c0_2 = arith.constant 0 : index
    %1 = vector.load %arg2[%c0_1, %c0_2] : memref<4x128xf32, #tpu.memory_space<vmem>>, vector<4x128xf32>
    %c0_3 = arith.constant 0 : index
    %c0_4 = arith.constant 0 : index
    %2 = vector.load %arg4[%c0_3, %c0_4] : memref<128x128xf32, #tpu.memory_space<vmem>>, vector<128x128xf32>
    %cst = arith.constant dense<0.000000e+00> : vector<8x128xf32>
    %3 = tpu.matmul %0, %1, %cst {dimension_numbers = #tpu.dot_dimension_numbers<[1], [0], [0], [1], [0, 0, 1, 1], [], []>} : vector<8x4xf32>, vector<4x128xf32>, vector<8x128xf32> -> vector<8x128xf32>
    %c0_5 = arith.constant 0 : index
    %c0_6 = arith.constant 0 : index
    %4 = vector.load %arg3[%c0_5, %c0_6] : memref<1x128xf32, #tpu.memory_space<vmem>>, vector<1x128xf32>
    %5 = vector.broadcast %4 : vector<1x128xf32> to vector<8x128xf32>
    %6 = arith.addf %3, %5 : vector<8x128xf32>
    %cst_7 = arith.constant 0.000000e+00 : f32
    %7 = vector.broadcast %cst_7 : f32 to vector<8x128xf32>
    %8 = arith.maximumf %6, %7 : vector<8x128xf32>
    %cst_8 = arith.constant dense<0.000000e+00> : vector<8x128xf32>
    %9 = tpu.matmul %8, %2, %cst_8 {dimension_numbers = #tpu.dot_dimension_numbers<[1], [0], [0], [1], [0, 0, 1, 1], [], []>} : vector<8x128xf32>, vector<128x128xf32>, vector<8x128xf32> -> vector<8x128xf32>
    %c0_9 = arith.constant 0 : index
    %c0_10 = arith.constant 0 : index
    %10 = vector.load %arg5[%c0_9, %c0_10] : memref<1x128xf32, #tpu.memory_space<vmem>>, vector<1x128xf32>
    %11 = vector.broadcast %10 : vector<1x128xf32> to vector<8x128xf32>
    %12 = arith.addf %9, %11 : vector<8x128xf32>
    %13 = tpu.iota {dimensions = array<i32: 1>} : vector<8x128xi32>
    %c8_i32 = arith.constant 8 : i32
    %14 = vector.broadcast %c8_i32 : i32 to vector<8x128xi32>
    %15 = arith.cmpi slt, %13, %14 : vector<8x128xi32>
    %cst_11 = arith.constant 0xFF800000 : f32
    %16 = vector.broadcast %cst_11 : f32 to vector<8x128xf32>
    %17 = arith.select %15, %12, %16 : vector<8x128xi1>, vector<8x128xf32>
    %cst_12 = arith.constant dense<0xFF800000> : vector<8xf32>
    %18 = vector.multi_reduction <maximumf>, %17, %cst_12 [1] : vector<8x128xf32> to vector<8xf32>
    %19 = vector.shape_cast %18 : vector<8xf32> to vector<8x1xf32>
    %20 = vector.broadcast %19 : vector<8x1xf32> to vector<8x128xf32>
    %21 = arith.subf %17, %20 : vector<8x128xf32>
    %22 = math.exp %21 : vector<8x128xf32>
    %cst_13 = arith.constant dense<0.000000e+00> : vector<8xf32>
    %23 = vector.multi_reduction <add>, %22, %cst_13 [1] : vector<8x128xf32> to vector<8xf32>
    %24 = vector.shape_cast %23 : vector<8xf32> to vector<8x1xf32>
    %25 = vector.broadcast %24 : vector<8x1xf32> to vector<8x128xf32>
    %26 = arith.divf %22, %25 : vector<8x128xf32>
    %c8_i32_14 = arith.constant 8 : i32
    %27 = vector.broadcast %c8_i32_14 : i32 to vector<8x128xi32>
    %28 = arith.cmpi eq, %13, %27 : vector<8x128xi32>
    %29 = arith.select %28, %12, %26 : vector<8x128xi1>, vector<8x128xf32>
    %c0_15 = arith.constant 0 : index
    %c0_16 = arith.constant 0 : index
    %30 = vector.load %arg6[%c0_15, %c0_16] : memref<8x128xf32, #tpu.memory_space<vmem>>, vector<8x128xf32>
    tpu.vector_store %arg6[%c0_15, %c0_16], %29 {strides = array<i32>} : memref<8x128xf32, #tpu.memory_space<vmem>>, vector<8x128xf32>,
    return
  }
  func.func @transform_0(%arg0: i32) -> (i32, i32) {
    %c0_i32 = arith.constant 0 : i32
    %c0_i32_0 = arith.constant 0 : i32
    return %arg0, %c0_i32 : i32, i32
  }
  func.func @transform_1(%arg0: i32) -> (i32, i32) {
    %c0_i32 = arith.constant 0 : i32
    %c0_i32_0 = arith.constant 0 : i32
    %c0_i32_1 = arith.constant 0 : i32
    return %c0_i32, %c0_i32_0 : i32, i32
  }
  func.func @transform_2(%arg0: i32) -> (i32, i32) {
    %c0_i32 = arith.constant 0 : i32
    %c0_i32_0 = arith.constant 0 : i32
    %c0_i32_1 = arith.constant 0 : i32
    return %c0_i32, %c0_i32_0 : i32, i32
  }
  func.func @transform_3(%arg0: i32) -> (i32, i32) {
    %c0_i32 = arith.constant 0 : i32
    %c0_i32_0 = arith.constant 0 : i32
    %c0_i32_1 = arith.constant 0 : i32
    return %c0_i32, %c0_i32_0 : i32, i32
  }
  func.func @transform_4(%arg0: i32) -> (i32, i32) {
    %c0_i32 = arith.constant 0 : i32
    %c0_i32_0 = arith.constant 0 : i32
    %c0_i32_1 = arith.constant 0 : i32
    return %c0_i32, %c0_i32_0 : i32, i32
  }
  func.func @transform_5(%arg0: i32) -> (i32, i32) {
    %c0_i32 = arith.constant 0 : i32
    %c0_i32_0 = arith.constant 0 : i32
    return %arg0, %c0_i32 : i32, i32
  }
}

</mosaic_0001>

<llo_original>
// kernel: tpu_custom_call.1
$region0: #{tpu_custom_call.1}
  #allocation0 [shape = 'u32[]', space=smem, size = 0x4, offset = 0x4, fixed_abs, tag = 'smem constant byte address 0x4 - core index']
  #allocation1 [shape = 'u32[144,128]{1,0:T(1,128)}', space=vmem, size = 0x12000, scoped, tag = 'internal scratch']
  %s0 = inlined_call_operand.vmem [shape: f32[8,4], index: 0, kind: input, shape index: {}]
  %s1 = inlined_call_operand.vmem [shape: f32[4,128], index: 1, kind: input, shape index: {}]
  %s2 = inlined_call_operand.vmem [shape: f32[1,128], index: 2, kind: input, shape index: {}]
  %s3 = inlined_call_operand.hbm [shape: f32[128,128], index: 3, kind: input, shape index: {}]
  %s4 = inlined_call_operand.vmem [shape: f32[1,128], index: 4, kind: input, shape index: {}]
  %s5 = inlined_call_operand.hbm [shape: f32[8,128], index: 5, kind: output, shape index: {}]
  %s6 = sld [smem:[#allocation0]]
  $region34: #{tpu_custom_call.1} parent=0
    _
  %s8 = ssub.s32 1, %s6
  %s9 = scalar_select 0, %s8, %s6
  $region1: #{tpu_custom_call.1} parent=0
    #allocation2 [shape = 'u8[65536]{0}', space=vmem, size = 0x10000, scoped, tag = 'input window, operand 3, single buffered']
    #allocation3 [shape = 's32[1]{0}', space=sflag, size = 0x4, scoped, tag = 'scoped memory for tpu_custom_call.1']
    #allocation4 [shape = 's32[1]{0}', space=sflag, size = 0x4, scoped, tag = 'scoped memory for tpu_custom_call.1']
    #allocation5 [shape = 'u8[4096]{0}', space=vmem, size = 0x1000, scoped, tag = 'output window, operand 0, single buffered']
    %10 = vsyncpa [#allocation3], 0
    %11 = vsyncpa [#allocation4], 0
    // Predicated region
    $region2: #{tpu_custom_call.1} parent=1 // pred_check
      _
    $region3: #{tpu_custom_call.1} parent=1 // pred_check_branch
      %13 = sbr.rel (0) target = $region5
    $region4: #{tpu_custom_call.1} parent=1 // pred_region
      _
    $region5: #{tpu_custom_call.1} parent=1 // pred_fallthru
      _
    // Predicated region
    $region6: #{tpu_custom_call.1} parent=1 // pred_check
      _
    $region7: #{tpu_custom_call.1} parent=1 // pred_check_branch
      %15 = sbr.rel (0) target = $region9
    $region8: #{tpu_custom_call.1} parent=1 // pred_region
      _
    $region9: #{tpu_custom_call.1} parent=1 // pred_fallthru
      _
    // Predicated region
    $region10: #{tpu_custom_call.1} parent=1 // pred_check
      _
    $region11: #{tpu_custom_call.1} parent=1 // pred_check_branch
      %17 = sbr.rel (0) target = $region13
    $region12: #{tpu_custom_call.1} parent=1 // pred_region
      _
    $region13: #{tpu_custom_call.1} parent=1 // pred_fallthru
      _
    // Predicated region
    $region14: #{tpu_custom_call.1} parent=1 // pred_check
      _
    $region15: #{tpu_custom_call.1} parent=1 // pred_check_branch
      %19 = sbr.rel (0) target = $region17
    $region16: #{tpu_custom_call.1} parent=1 // pred_region
      %s21 = ssub.s32 2048, 2048
      %22 = vsyncadd [#allocation3], %s21
      %s23 = sshll.u32 [#allocation2], 4
      %s24 = int_to_ptr.vmem [resolvable:$true] %s23
      %29 = dma.hbm_to_vmem [thread:$0]  %s3, 2048, %s24, [#allocation3], 128, 128, 8
    $region17: #{tpu_custom_call.1} parent=1 // pred_fallthru
      _
    // Predicated region
    $region18: #{tpu_custom_call.1} parent=1 // pred_check
      _
    $region19: #{tpu_custom_call.1} parent=1 // pred_check_branch
      %31 = sbr.rel (0) target = $region21
    $region20: #{tpu_custom_call.1} parent=1 // pred_region
      _
    $region21: #{tpu_custom_call.1} parent=1 // pred_fallthru
      _
    // Predicated region
    $region22: #{tpu_custom_call.1} parent=1 // pred_check
      _
    $region23: #{tpu_custom_call.1} parent=1 // pred_check_branch
      %33 = sbr.rel (0) target = $region25
    $region24: #{tpu_custom_call.1} parent=1 // pred_region
      %34 = dma.done [#allocation3], 2048
    $region25: #{tpu_custom_call.1} parent=1 // pred_fallthru
      _
    %v35 = vld [vmem:[%s0] sm:$0xff]
    %v36 = vld [vmem:[%s1] sm:$0xf]
    %v37 = vld [vmem:[#allocation2] sm:$0xff]
    %v38 = vld [vmem:[#allocation2 + $0x8] sm:$0xff]
    %v39 = vld [vmem:[#allocation2 + $0x10] sm:$0xff]
    %v40 = vld [vmem:[#allocation2 + $0x18] sm:$0xff]
    %v41 = vld [vmem:[#allocation2 + $0x20] sm:$0xff]
    %v42 = vld [vmem:[#allocation2 + $0x28] sm:$0xff]
    %v43 = vld [vmem:[#allocation2 + $0x30] sm:$0xff]
    %v44 = vld [vmem:[#allocation2 + $0x38] sm:$0xff]
    %v45 = vld [vmem:[#allocation2 + $0x40] sm:$0xff]
    %v46 = vld [vmem:[#allocation2 + $0x48] sm:$0xff]
    %v47 = vld [vmem:[#allocation2 + $0x50] sm:$0xff]
    %v48 = vld [vmem:[#allocation2 + $0x58] sm:$0xff]
    %v49 = vld [vmem:[#allocation2 + $0x60] sm:$0xff]
    %v50 = vld [vmem:[#allocation2 + $0x68] sm:$0xff]
    %v51 = vld [vmem:[#allocation2 + $0x70] sm:$0xff]
    %v52 = vld [vmem:[#allocation2 + $0x78] sm:$0xff]
    %v53 = vld [vmem:[%s2] sm:$0x1]
    %v55 = vlaneseq
    %v56 = vshrl.u32 %v55, 7
    %v57 = vsub.s32 0, %v56
    %v58 = vrot.slane %v53, %v57
    %vm60 = vcmask 31744
    %v62 = vsel %vm60, %v35, 0
    %vm64 = vcmask 1043456
    %v66 = vsel %vm64, %v36, 0
    %68 = vmatprep.subr.mxu0 0.0
    %69 = vmatpush1.msra.mxu0 %v66
    %70 = vmatprep.subr.mxu0 0.0
    %71 = vmatpush1.msra.mxu0 0.0
    %72 = vmatprep.subr.mxu0 0.0
    %73 = vmatpush1.msra.mxu0 0.0
    %74 = vmatprep.subr.mxu0 0.0
    %75 = vmatpush1.msra.mxu0 0.0
    %76 = vmatprep.subr.mxu0 0.0
    %77 = vmatpush1.msra.mxu0 0.0
    %78 = vmatprep.subr.mxu0 0.0
    %79 = vmatpush1.msra.mxu0 0.0
    %80 = vmatprep.subr.mxu0 0.0
    %81 = vmatpush1.msra.mxu0 0.0
    %82 = vmatprep.subr.mxu0 0.0
    %83 = vmatpush1.msra.mxu0 0.0
    %84 = vmatprep.subr.mxu0 0.0
    %85 = vmatpush1.msra.mxu0 0.0
    %86 = vmatprep.subr.mxu0 0.0
    %87 = vmatpush1.msra.mxu0 0.0
    %88 = vmatprep.subr.mxu0 0.0
    %89 = vmatpush1.msra.mxu0 0.0
    %90 = vmatprep.subr.mxu0 0.0
    %91 = vmatpush1.msra.mxu0 0.0
    %92 = vmatprep.subr.mxu0 0.0
    %93 = vmatpush1.msra.mxu0 0.0
    %94 = vmatprep.subr.mxu0 0.0
    %95 = vmatpush1.msra.mxu0 0.0
    %96 = vmatprep.subr.mxu0 0.0
    %97 = vmatpush1.msra.mxu0 0.0
    %98 = vmatprep.subr.mxu0 0.0
    %99 = vmatpush1.msra.mxu0 0.0
    %100 = vmatprep.subr.mxu0 0.0
    %101 = vmatpush1.msra.mxu0 0.0
    %102 = vmatprep.subr.mxu0 0.0
    %103 = vmatpush1.msra.mxu0 0.0
    %104 = vmatprep.subr.mxu0 0.0
    %105 = vmatpush1.msra.mxu0 0.0
    %106 = vmatprep.subr.mxu0 0.0
    %107 = vmatpush1.msra.mxu0 0.0
    %108 = vmatprep.subr.mxu0 0.0
    %109 = vmatpush1.msra.mxu0 0.0
    %110 = vmatprep.subr.mxu0 0.0
    %111 = vmatpush1.msra.mxu0 0.0
    %112 = vmatprep.subr.mxu0 0.0
    %113 = vmatpush1.msra.mxu0 0.0
    %114 = vmatprep.subr.mxu0 0.0
    %115 = vmatpush1.msra.mxu0 0.0
    %116 = vmatprep.subr.mxu0 0.0
    %117 = vmatpush1.msra.mxu0 0.0
    %118 = vmatprep.subr.mxu0 0.0
    %119 = vmatpush1.msra.mxu0 0.0
    %120 = vmatprep.subr.mxu0 0.0
    %121 = vmatpush1.msra.mxu0 0.0
    %122 = vmatprep.subr.mxu0 0.0
    %123 = vmatpush1.msra.mxu0 0.0
    %124 = vmatprep.subr.mxu0 0.0
    %125 = vmatpush1.msra.mxu0 0.0
    %126 = vmatprep.subr.mxu0 0.0
    %127 = vmatpush1.msra.mxu0 0.0
    %128 = vmatprep.subr.mxu0 0.0
    %129 = vmatpush1.msra.mxu0 0.0
    %130 = vmatprep.subr.mxu0 0.0
    %131 = vmatpush1.msra.mxu0 0.0
    %132 = vmatprep.mubr.f32.mxu0 0.0
    %133 = vmatmul.mubr.f32.gmra.mrb[0].mxu0 %v62
    %v134 = vpop.f32.mrb[0].mxu0
    %v135 = vadd.f32 %v58, %v134
    %v136 = vpop.f32.mrb[0].mxu0
    %137 = vdwg.mxu0
    %v138 = vmax.f32 %v135, 0.0
    %v139 = vld [vmem:[%s4] sm:$0x1]
    %v141 = vlaneseq
    %v142 = vshrl.u32 %v141, 7
    %v143 = vsub.s32 0, %v142
    %v144 = vrot.slane %v139, %v143
    %146 = vmatprep.subr.mxu0 0.0
    %147 = vmatpush1.msra.mxu0 %v37
    %148 = vmatprep.subr.mxu0 0.0
    %149 = vmatpush1.msra.mxu0 %v38
    %150 = vmatprep.subr.mxu0 0.0
    %151 = vmatpush1.msra.mxu0 %v39
    %152 = vmatprep.subr.mxu0 0.0
    %153 = vmatpush1.msra.mxu0 %v40
    %154 = vmatprep.subr.mxu0 0.0
    %155 = vmatpush1.msra.mxu0 %v41
    %156 = vmatprep.subr.mxu0 0.0
    %157 = vmatpush1.msra.mxu0 %v42
    %158 = vmatprep.subr.mxu0 0.0
    %159 = vmatpush1.msra.mxu0 %v43
    %160 = vmatprep.subr.mxu0 0.0
    %161 = vmatpush1.msra.mxu0 %v44
    %162 = vmatprep.subr.mxu0 0.0
    %163 = vmatpush1.msra.mxu0 %v45
    %164 = vmatprep.subr.mxu0 0.0
    %165 = vmatpush1.msra.mxu0 %v46
    %166 = vmatprep.subr.mxu0 0.0
    %167 = vmatpush1.msra.mxu0 %v47
    %168 = vmatprep.subr.mxu0 0.0
    %169 = vmatpush1.msra.mxu0 %v48
    %170 = vmatprep.subr.mxu0 0.0
    %171 = vmatpush1.msra.mxu0 %v49
    %172 = vmatprep.subr.mxu0 0.0
    %173 = vmatpush1.msra.mxu0 %v50
    %174 = vmatprep.subr.mxu0 0.0
    %175 = vmatpush1.msra.mxu0 %v51
    %176 = vmatprep.subr.mxu0 0.0
    %177 = vmatpush1.msra.mxu0 %v52
    %178 = vmatprep.subr.mxu0 0.0
    %179 = vmatpush1.msra.mxu0 0.0
    %180 = vmatprep.subr.mxu0 0.0
    %181 = vmatpush1.msra.mxu0 0.0
    %182 = vmatprep.subr.mxu0 0.0
    %183 = vmatpush1.msra.mxu0 0.0
    %184 = vmatprep.subr.mxu0 0.0
    %185 = vmatpush1.msra.mxu0 0.0
    %186 = vmatprep.subr.mxu0 0.0
    %187 = vmatpush1.msra.mxu0 0.0
    %188 = vmatprep.subr.mxu0 0.0
    %189 = vmatpush1.msra.mxu0 0.0
    %190 = vmatprep.subr.mxu0 0.0
    %191 = vmatpush1.msra.mxu0 0.0
    %192 = vmatprep.subr.mxu0 0.0
    %193 = vmatpush1.msra.mxu0 0.0
    %194 = vmatprep.subr.mxu0 0.0
    %195 = vmatpush1.msra.mxu0 0.0
    %196 = vmatprep.subr.mxu0 0.0
    %197 = vmatpush1.msra.mxu0 0.0
    %198 = vmatprep.subr.mxu0 0.0
    %199 = vmatpush1.msra.mxu0 0.0
    %200 = vmatprep.subr.mxu0 0.0
    %201 = vmatpush1.msra.mxu0 0.0
    %202 = vmatprep.subr.mxu0 0.0
    %203 = vmatpush1.msra.mxu0 0.0
    %204 = vmatprep.subr.mxu0 0.0
    %205 = vmatpush1.msra.mxu0 0.0
    %206 = vmatprep.subr.mxu0 0.0
    %207 = vmatpush1.msra.mxu0 0.0
    %208 = vmatprep.subr.mxu0 0.0
    %209 = vmatpush1.msra.mxu0 0.0
    %210 = vmatprep.mubr.f32.mxu0 0.0
    %211 = vmatmul.mubr.f32.gmra.mrb[0].mxu0 %v138
    %v212 = vpop.f32.mrb[0].mxu0
    %v213 = vadd.f32 %v144, %v212
    %v214 = vpop.f32.mrb[0].mxu0
    %215 = vdwg.mxu0
    %v216 = vlaneseq
    %v217 = vand.u32 %v216, 127
    %vm218 = vcmp.lt.s32.totalorder %v217, 8
    %v219 = vsel %vm218, %v213, -inf
    %220 = vmax.xlane.f32.xlu0 %v219
    %v221 = vpop.xlane.xlu0 %220
    %v222 = vsub.f32 %v219, %v221
    %v223 = vmul.f32 %v222, 1.442695
    %v224 = vpow.pop %v223
    %225 = vadd.xlane.f32.xlu0 %v224
    %v226 = vpop.xlane.xlu0 %225
    %v227 = vrcp.pop %v226
    %v228 = vmul.f32 %v224, %v227
    %vm229 = vcmp.eq.s32.totalorder %v217, 8
    %v230 = vsel %vm229, %v213, %v228
    %231 = vst [vmem:[#allocation5] sm:$0xff] %v230
    // Predicated region
    $region26: #{tpu_custom_call.1} parent=1 // pred_check
      _
    $region27: #{tpu_custom_call.1} parent=1 // pred_check_branch
      %233 = sbr.rel (0) target = $region29
    $region28: #{tpu_custom_call.1} parent=1 // pred_region
      %s235 = ssub.s32 128, 128
      %236 = vsyncadd [#allocation4], %s235
      %s238 = sshll.u32 [#allocation5], 4
      %s239 = int_to_ptr.vmem [resolvable:$true] %s238
      %241 = dma.vmem_to_hbm [thread:$0]  %s239, 128, %s5, [#allocation4]
    $region29: #{tpu_custom_call.1} parent=1 // pred_fallthru
      _
    // Predicated region
    $region30: #{tpu_custom_call.1} parent=1 // pred_check
      _
    $region31: #{tpu_custom_call.1} parent=1 // pred_check_branch
      %243 = sbr.rel (0) target = $region33
    $region32: #{tpu_custom_call.1} parent=1 // pred_region
      %244 = dma.done [#allocation4], 128
    $region33: #{tpu_custom_call.1} parent=1 // pred_fallthru
      _
    %245 = vsyncpa [#allocation3], 1
    %246 = vsyncpa [#allocation4], 1

</llo_original>
